<compile_context>
chip_gen: v7x
topology: tpu7x:2x2x1
jax: 0.10.0
libtpu: 0.0.40
codegen_flags: <defaults>
</compile_context>

<pallas_src>
import functools

import jax
import jax.numpy as jnp
from jax.experimental import pallas as pl
from jax.experimental.pallas import tpu as pltpu


def _round_up(x, m):
    return ((x + m - 1) // m) * m


def _seg_conv1x1_kernel(x_ref, w_ref, b_ref, o_ref):
    # x_ref: (C_in, TS)   VMEM  activation tile (channels x spatial, NCHW-native)
    # w_ref: (Cp8, C_in)  VMEM  full weight, C_out padded to 8 sublanes
    # b_ref: (Cp8, 1)     VMEM  bias (f32), broadcast over lanes
    # o_ref: (Cp8, TS)    VMEM  output tile, lane-dense over spatial
    acc = jnp.dot(w_ref[...], x_ref[...], preferred_element_type=jnp.float32)
    o_ref[...] = (acc + b_ref[...]).astype(o_ref.dtype)


@functools.partial(jax.jit, static_argnames=("tile_spatial",))
def segmenter_forward(x_nchw, weight, bias, *, tile_spatial=2048):
    """1x1 conv forward (Segmenter head).

    x_nchw : (B, C_in, H, W)                    float32 or bfloat16
    weight : (C_out, C_in) or (C_out, C_in,1,1) Conv2d weight
    bias   : (C_out,)
    returns: (B, C_out, H, W)  in x_nchw.dtype
    """
    B, C_in, H, W = x_nchw.shape
    if weight.ndim == 4:  # accept raw Conv2d weight (C_out, C_in, 1, 1)
        weight = weight.reshape(weight.shape[0], weight.shape[1])
    C_out = weight.shape[0]
    dtype = x_nchw.dtype

    HW = H * W
    Cp8 = _round_up(C_out, 8)

    # Spatial (lane) tile: a multiple of 128, capped for small feature maps.
    ts = _round_up(min(int(tile_spatial), _round_up(HW, 128)), 128)
    HWpad = _round_up(HW, ts)

    # Free reshape (contiguous last-two-dim merge), no transpose.
    x_flat = x_nchw.reshape(B, C_in, HW)
    if HWpad != HW:
        x_flat = jnp.pad(x_flat, ((0, 0), (0, 0), (0, HWpad - HW)))

    w_pad = jnp.zeros((Cp8, C_in), dtype).at[:C_out, :].set(weight.astype(dtype))
    b_pad = jnp.zeros((Cp8, 1), jnp.float32).at[:C_out, 0].set(bias.astype(jnp.float32))

    num_tiles = HWpad // ts
    itemsize = jnp.dtype(dtype).itemsize
    cost = pl.CostEstimate(
        flops=2 * B * HW * C_in * C_out,
        transcendentals=0,
        bytes_accessed=(B * C_in * HWpad * itemsize      # activations read
                        + Cp8 * C_in * itemsize          # weight read
                        + Cp8 * 4                        # bias read
                        + B * Cp8 * HWpad * itemsize),   # output write
    )

    out_pad = pl.pallas_call(
        _seg_conv1x1_kernel,
        out_shape=jax.ShapeDtypeStruct((B, Cp8, HWpad), dtype),
        grid_spec=pltpu.PrefetchScalarGridSpec(
            num_scalar_prefetch=0,
            grid=(B, num_tiles),
            in_specs=[
                # batch dim squeezed out of the kernel view
                pl.BlockSpec((None, C_in, ts), lambda b, s: (b, 0, s)),
                pl.BlockSpec((Cp8, C_in), lambda b, s: (0, 0)),   # full weight
                pl.BlockSpec((Cp8, 1), lambda b, s: (0, 0)),      # bias
            ],
            out_specs=pl.BlockSpec((None, Cp8, ts), lambda b, s: (b, 0, s)),
        ),
        compiler_params=pltpu.CompilerParams(
            dimension_semantics=("parallel", "parallel"),
        ),
        cost_estimate=cost,
    )(x_flat, w_pad, b_pad)

    # Slice off the 8-sublane / spatial padding (tiny output tensor).
    return out_pad[:, :C_out, :HW].reshape(B, C_out, H, W)


def _reference_forward(x_nchw, weight, bias):
    # Pure-JAX reference of the 1x1 conv for validation.
    return (jnp.einsum("bchw,oc->bohw", x_nchw.astype(jnp.float32),
                       weight.astype(jnp.float32))
            + bias.astype(jnp.float32)[None, :, None, None])


if __name__ == "__main__":
    B, n_classes = 2, 5
    # The four Segmenter heads of DilateResUNetMultiLvSeg (in_channel, H, W).
    # (96, 20, 20) exercises the ragged-spatial padding path (HW=400).
    head_configs = [
        (512, 8, 8),     # aux_seg_sr
        (128, 16, 16),   # aux_seg_mmr
        (96, 20, 20),    # aux_seg_mr
        (64, 32, 32),    # seg_conv_hr
    ]

    key = jax.random.PRNGKey(0)
    for C_in, H, W in head_configs:
        key, kx, kw, kb = jax.random.split(key, 4)
        x = jax.random.normal(kx, (B, C_in, H, W), jnp.float32)
        bound = 1.0 / (C_in ** 0.5)   # Conv2d default init range, kernel_size=1
        weight = jax.random.uniform(kw, (n_classes, C_in), jnp.float32, -bound, bound)
        bias = jax.random.uniform(kb, (n_classes,), jnp.float32, -bound, bound)

        out = jax.block_until_ready(segmenter_forward(x, weight, bias))
        ref = _reference_forward(x, weight, bias)

        assert out.shape == (B, n_classes, H, W), out.shape
        max_err = float(jnp.max(jnp.abs(out - ref)))
        assert max_err < 1e-4, (C_in, H, W, max_err)

    print("KERNEL_OK")
</pallas_src>

<mosaic_0001>
module attributes {stable_mosaic.version = 11 : i64} {
  func.func @_seg_conv1x1_kernel(%arg0: i32, %arg1: i32, %arg2: memref<1x512x128xf32, #tpu.memory_space<vmem>>, %arg3: memref<8x512xf32, #tpu.memory_space<vmem>>, %arg4: memref<8x1xf32, #tpu.memory_space<vmem>>, %arg5: memref<1x8x128xf32, #tpu.memory_space<vmem>>) attributes {dimension_semantics = [#tpu.dimension_semantics<parallel>, #tpu.dimension_semantics<parallel>], iteration_bounds = array<i64: 2, 1>, scalar_prefetch = 0 : i64, scratch_operands = 0 : i64, tpu.core_type = #tpu.core_type<tc>, window_params = [{transform_indices = @transform_0, window_bounds = array<i64: 1, 512, 128>}, {pipeline_mode = #tpu.pipeline_mode<synchronous>, transform_indices = @transform_1, window_bounds = array<i64: 8, 512>}, {pipeline_mode = #tpu.pipeline_mode<synchronous>, transform_indices = @transform_2, window_bounds = array<i64: 8, 1>}, {transform_indices = @transform_3, window_bounds = array<i64: 1, 8, 128>}]} {
    %c0 = arith.constant 0 : index
    %c0_0 = arith.constant 0 : index
    %0 = vector.load %arg3[%c0, %c0_0] : memref<8x512xf32, #tpu.memory_space<vmem>>, vector<8x512xf32>
    %c0_1 = arith.constant 0 : index
    %c0_2 = arith.constant 0 : index
    %c0_3 = arith.constant 0 : index
    %1 = vector.load %arg2[%c0_1, %c0_2, %c0_3] : memref<1x512x128xf32, #tpu.memory_space<vmem>>, vector<1x512x128xf32>
    %2 = vector.shape_cast %1 : vector<1x512x128xf32> to vector<512x128xf32>
    %cst = arith.constant dense<0.000000e+00> : vector<8x128xf32>
    %3 = tpu.matmul %0, %2, %cst {dimension_numbers = #tpu.dot_dimension_numbers<[1], [0], [0], [1], [0, 0, 1, 1], [], []>} : vector<8x512xf32>, vector<512x128xf32>, vector<8x128xf32> -> vector<8x128xf32>
    %c0_4 = arith.constant 0 : index
    %c0_5 = arith.constant 0 : index
    %4 = vector.load %arg4[%c0_4, %c0_5] : memref<8x1xf32, #tpu.memory_space<vmem>>, vector<8x1xf32>
    %5 = vector.broadcast %4 : vector<8x1xf32> to vector<8x128xf32>
    %6 = arith.addf %3, %5 : vector<8x128xf32>
    %c0_6 = arith.constant 0 : index
    %c0_7 = arith.constant 0 : index
    %c0_8 = arith.constant 0 : index
    %7 = vector.load %arg5[%c0_6, %c0_7, %c0_8] : memref<1x8x128xf32, #tpu.memory_space<vmem>>, vector<1x8x128xf32>
    %8 = vector.shape_cast %7 : vector<1x8x128xf32> to vector<8x128xf32>
    %9 = vector.shape_cast %6 : vector<8x128xf32> to vector<1x8x128xf32>
    tpu.vector_store %arg5[%c0_6, %c0_7, %c0_8], %9 {strides = array<i32>} : memref<1x8x128xf32, #tpu.memory_space<vmem>>, vector<1x8x128xf32>,
    return
  }
  func.func @transform_0(%arg0: i32, %arg1: i32) -> (i32, i32, i32) {
    %c0_i32 = arith.constant 0 : i32
    %c0_i32_0 = arith.constant 0 : i32
    return %arg0, %c0_i32, %arg1 : i32, i32, i32
  }
  func.func @transform_1(%arg0: i32, %arg1: i32) -> (i32, i32) {
    %c0_i32 = arith.constant 0 : i32
    %c0_i32_0 = arith.constant 0 : i32
    %c0_i32_1 = arith.constant 0 : i32
    return %c0_i32, %c0_i32_0 : i32, i32
  }
  func.func @transform_2(%arg0: i32, %arg1: i32) -> (i32, i32) {
    %c0_i32 = arith.constant 0 : i32
    %c0_i32_0 = arith.constant 0 : i32
    %c0_i32_1 = arith.constant 0 : i32
    return %c0_i32, %c0_i32_0 : i32, i32
  }
  func.func @transform_3(%arg0: i32, %arg1: i32) -> (i32, i32, i32) {
    %c0_i32 = arith.constant 0 : i32
    %c0_i32_0 = arith.constant 0 : i32
    return %arg0, %c0_i32, %arg1 : i32, i32, i32
  }
}

</mosaic_0001>

<llo_original>
// kernel: segmenter_forward.1
$region0: #{segmenter_forward.1}
  #allocation0 [shape = 'u32[]', space=smem, size = 0x4, offset = 0x4, fixed_abs, tag = 'smem constant byte address 0x4 - core index']
  #allocation1 [shape = 'u32[144,128]{1,0:T(1,128)}', space=vmem, size = 0x12000, scoped, tag = 'internal scratch']
  %s0 = inlined_call_operand.vmem [shape: f32[2,512,128], index: 0, kind: input, shape index: {}]
  %s1 = inlined_call_operand.vmem [shape: f32[8,512], index: 1, kind: input, shape index: {}]
  %s2 = inlined_call_operand.vmem [shape: f32[8,1], index: 2, kind: input, shape index: {}]
  %s3 = inlined_call_operand.vmem [shape: f32[2,8,128], index: 3, kind: output, shape index: {}]
  %s4 = sld [smem:[#allocation0]]
  $region45: #{segmenter_forward.1} parent=0
    _
  %s6 = ssub.s32 1, %s4
  %s7 = scalar_select 0, %s6, %s4
  loop: start=0, step=1, limit=4
  $region2: #{segmenter_forward.1} parent=0 // loop_pre_header
    _
  $region3: #{segmenter_forward.1} parent=0 // loop_header
    %s9 = sphi 0, %s13
    %p10 = scmp.ge.s32.totalorder %s9, 4
    %s16 = sphi 0, %s28
    %s17 = sphi 0, %s24
    %s18 = sphi 0, %s16
    %s19 = sphi 0, %s17
    %s20 = sphi 0, %s18
    %s21 = sphi 0, %s19
    %s33 = sphi 0, %s35
    %s36 = sphi 0, %s33
    %s37 = sphi 0, %s36
    %s53 = sphi 0, %s37
    %s57 = sphi 0, %s57
    %s59 = sphi 0, %s57
    %s60 = sphi 0, %s59
    %s74 = sphi 0, %s60
    %s78 = sphi 0, %s78
    %s80 = sphi 0, %s78
    %s81 = sphi 0, %s80
    %s95 = sphi 0, %s81
    %s103 = sphi 0, %s105
    %s106 = sphi 0, %s103
    %s107 = sphi 0, %s106
    %s123 = sphi 0, %s107
  $region4: #{segmenter_forward.1} parent=0 // loop_header_branch
    %12 = sbr.rel (%p10) target = $region8
  $region5: #{segmenter_forward.1} parent=0 // loop_body
    %s14 = ssub.s32 %s9, 1
    %s15 = ssub.s32 %s9, 2
    %s22 = sadd.s32 1, %s17
    %p23 = scmp.ge.s32.totalorder %s22, 1
    %s24 = scalar_select %p23, 0, %s22
    %s25 = sadd.s32 1, %s16
    %s26 = scalar_select %p23, %s25, %s16
    %p27 = scmp.ge.s32.totalorder %s26, 2
    %s28 = scalar_select %p27, 0, %s26
    %s29 = ssub.s32 %s16, %s28
    %s30 = ssub.s32 %s17, %s24
    %s31 = sor.u32 %s29, %s30
    %p32 = scmp.eq.s32.totalorder %s31, 0
    %s34 = sadd.s32 %s33, 1
    %s35 = scalar_select %p32, %s33, %s34
    %p38 = pneg %p32
    %p39 = scmp.eq.s32.totalorder %s9, 1
    %p40 = por %p38, %p39
    %p41 = scmp.ne.s32.totalorder %s33, %s36
    %p42 = scmp.eq.s32.totalorder %s9, 0
    %p43 = por %p41, %p42
    %p44 = scmp.ne.s32.totalorder %s33, %s36
    %p45 = scmp.eq.s32.totalorder %s14, 1
    %p46 = por %p44, %p45
    %p47 = scmp.ne.s32.totalorder %s36, %s37
    %p48 = scmp.eq.s32.totalorder %s14, 0
    %p49 = por %p47, %p48
    %p50 = scmp.ne.s32.totalorder %s36, %s37
    %p51 = scmp.eq.s32.totalorder %s15, 1
    %p52 = por %p50, %p51
    %p54 = scmp.ne.s32.totalorder %s37, %s53
    %p55 = scmp.eq.s32.totalorder %s15, 0
    %p56 = por %p54, %p55
    %s58 = sadd.s32 %s57, 1
    %p61 = scmp.eq.s32.totalorder %s9, 1
    %p62 = scmp.ne.s32.totalorder %s57, %s59
    %p63 = scmp.eq.s32.totalorder %s9, 0
    %p64 = por %p62, %p63
    %p65 = scmp.ne.s32.totalorder %s57, %s59
    %p66 = scmp.eq.s32.totalorder %s14, 1
    %p67 = por %p65, %p66
    %p68 = scmp.ne.s32.totalorder %s59, %s60
    %p69 = scmp.eq.s32.totalorder %s14, 0
    %p70 = por %p68, %p69
    %p71 = scmp.ne.s32.totalorder %s59, %s60
    %p72 = scmp.eq.s32.totalorder %s15, 1
    %p73 = por %p71, %p72
    %p75 = scmp.ne.s32.totalorder %s60, %s74
    %p76 = scmp.eq.s32.totalorder %s15, 0
    %p77 = por %p75, %p76
    %s79 = sadd.s32 %s78, 1
    %p82 = scmp.eq.s32.totalorder %s9, 1
    %p83 = scmp.ne.s32.totalorder %s78, %s80
    %p84 = scmp.eq.s32.totalorder %s9, 0
    %p85 = por %p83, %p84
    %p86 = scmp.ne.s32.totalorder %s78, %s80
    %p87 = scmp.eq.s32.totalorder %s14, 1
    %p88 = por %p86, %p87
    %p89 = scmp.ne.s32.totalorder %s80, %s81
    %p90 = scmp.eq.s32.totalorder %s14, 0
    %p91 = por %p89, %p90
    %p92 = scmp.ne.s32.totalorder %s80, %s81
    %p93 = scmp.eq.s32.totalorder %s15, 1
    %p94 = por %p92, %p93
    %p96 = scmp.ne.s32.totalorder %s81, %s95
    %p97 = scmp.eq.s32.totalorder %s15, 0
    %p98 = por %p96, %p97
    %s99 = ssub.s32 %s16, %s28
    %s100 = ssub.s32 %s17, %s24
    %s101 = sor.u32 %s99, %s100
    %p102 = scmp.eq.s32.totalorder %s101, 0
    %s104 = sadd.s32 %s103, 1
    %s105 = scalar_select %p102, %s103, %s104
    %p108 = pneg %p102
    %p109 = scmp.eq.s32.totalorder %s9, 1
    %p110 = por %p108, %p109
    %p111 = scmp.ne.s32.totalorder %s103, %s106
    %p112 = scmp.eq.s32.totalorder %s9, 0
    %p113 = por %p111, %p112
    %p114 = scmp.ne.s32.totalorder %s103, %s106
    %p115 = scmp.eq.s32.totalorder %s14, 1
    %p116 = por %p114, %p115
    %p117 = scmp.ne.s32.totalorder %s106, %s107
    %p118 = scmp.eq.s32.totalorder %s14, 0
    %p119 = por %p117, %p118
    %p120 = scmp.ne.s32.totalorder %s106, %s107
    %p121 = scmp.eq.s32.totalorder %s15, 1
    %p122 = por %p120, %p121
    %p124 = scmp.ne.s32.totalorder %s107, %s123
    %p125 = scmp.eq.s32.totalorder %s15, 0
    %p126 = por %p124, %p125
    %p127 = scmp.le.s32.totalorder 1, %s9
    %p128 = scmp.lt.s32.totalorder %s9, 3
    %p129 = pnand %p127, %p128
    %p130 = pneg %p129
    // Predicated region
    $region9: #{segmenter_forward.1} parent=5 // pred_check
      _
    $region10: #{segmenter_forward.1} parent=5 // pred_check_branch
      %132 = sbr.rel (%p129) target = $region12
    $region11: #{segmenter_forward.1} parent=5 // pred_region
      %s133 = ssub.s32 %s9, 1
      // Predicated region
      $region13: #{segmenter_forward.1} parent=11 // pred_check
        %p134 = pneg %p70
      $region14: #{segmenter_forward.1} parent=11 // pred_check_branch
        %136 = sbr.rel (%p134) target = $region16
      $region15: #{segmenter_forward.1} parent=11 // pred_region
        _
      $region16: #{segmenter_forward.1} parent=11 // pred_fallthru
        _
      // Predicated region
      $region17: #{segmenter_forward.1} parent=11 // pred_check
        %p137 = pneg %p91
      $region18: #{segmenter_forward.1} parent=11 // pred_check_branch
        %139 = sbr.rel (%p137) target = $region20
      $region19: #{segmenter_forward.1} parent=11 // pred_region
        _
      $region20: #{segmenter_forward.1} parent=11 // pred_fallthru
        _
    $region12: #{segmenter_forward.1} parent=5 // pred_fallthru
      _
    %p140 = scmp.lt.s32.totalorder %s9, 2
    // Predicated region
    $region21: #{segmenter_forward.1} parent=5 // pred_check
      %p141 = pneg %p140
    $region22: #{segmenter_forward.1} parent=5 // pred_check_branch
      %143 = sbr.rel (%p141) target = $region24
    $region23: #{segmenter_forward.1} parent=5 // pred_region
      // Predicated region
      $region25: #{segmenter_forward.1} parent=23 // pred_check
        %p144 = pneg %p43
      $region26: #{segmenter_forward.1} parent=23 // pred_check_branch
        %146 = sbr.rel (%p144) target = $region28
      $region27: #{segmenter_forward.1} parent=23 // pred_region
        %p147 = scmp.lt.s32.totalorder %s16, 1
        %s148 = scalar_select %p147, %s16, 1
        %p149 = scmp.lt.s32.totalorder %s17, 0
        %s150 = scalar_select %p149, %s17, 0
        %s151 = smul.addr %s148, 64
        %s152 = sadd.s32 %s150, %s151
        %s153 = smul.addr %s152, 8
        %s154 = scalar_lea.vmem %s0, %s153
      $region28: #{segmenter_forward.1} parent=23 // pred_fallthru
        _
    $region24: #{segmenter_forward.1} parent=5 // pred_fallthru
      _
    %p155 = scmp.le.s32.totalorder 1, %s9
    %p156 = scmp.lt.s32.totalorder %s9, 3
    %p157 = pnand %p155, %p156
    %p158 = pneg %p157
    // Predicated region
    $region29: #{segmenter_forward.1} parent=5 // pred_check
      _
    $region30: #{segmenter_forward.1} parent=5 // pred_check_branch
      %160 = sbr.rel (%p157) target = $region32
    $region31: #{segmenter_forward.1} parent=5 // pred_region
      %s161 = ssub.s32 %s9, 1
      %p162 = scmp.lt.s32.totalorder %s18, 1
      %s163 = scalar_select %p162, %s18, 1
      %p164 = scmp.lt.s32.totalorder %s19, 0
      %s165 = scalar_select %p164, %s19, 0
      %s166 = smul.addr %s163, 64
      %s167 = sadd.s32 %s165, %s166
      %s168 = smul.addr %s167, 8
      %s169 = scalar_lea.vmem %s0, %s168
      %p170 = pneg %p49
      %p171 = pneg %p46
      %p172 = pneg %p70
      %p173 = pneg %p67
      %p174 = pneg %p91
      %p175 = pneg %p88
      %p176 = pneg %p119
      %p177 = pneg %p116
      %p178 = scmp.lt.s32.totalorder %s18, 1
      %s179 = scalar_select %p178, %s18, 1
      %p180 = scmp.lt.s32.totalorder %s19, 0
      %s181 = scalar_select %p180, %s19, 0
      %s182 = sadd.s32 %s181, %s179
      %s183 = smul.addr %s182, 8
      %s184 = scalar_lea.vmem %s3, %s183
      %p185 = scmp.lt.s32.totalorder %s18, 1
      %s186 = scalar_select %p185, %s18, 1
      %p187 = scmp.lt.s32.totalorder %s19, 0
      %s188 = scalar_select %p187, %s19, 0
      %s189 = smul.addr %s186, 64
      %s190 = sadd.s32 %s188, %s189
      %s191 = smul.addr %s190, 8
      %s192 = scalar_lea.vmem %s0, %s191
      %p193 = scmp.lt.s32.totalorder %s18, 1
      %s194 = scalar_select %p193, %s18, 1
      %p195 = scmp.lt.s32.totalorder %s19, 0
      %s196 = scalar_select %p195, %s19, 0
      %s197 = sadd.s32 %s196, %s194
      %s198 = smul.addr %s197, 8
      %s199 = scalar_lea.vmem %s3, %s198
      %v200 = vld [vmem:[%s1] sm:$0xff]
      %v201 = vld [vmem:[%s1 + $0x8] sm:$0xff]
      %v202 = vld [vmem:[%s1 + $0x10] sm:$0xff]
      %v203 = vld [vmem:[%s1 + $0x18] sm:$0xff]
      %v204 = vld [vmem:[%s192] sm:$0xff]
      %v205 = vld [vmem:[%s192 + $0x8] sm:$0xff]
      %v206 = vld [vmem:[%s192 + $0x10] sm:$0xff]
      %v207 = vld [vmem:[%s192 + $0x18] sm:$0xff]
      %v208 = vld [vmem:[%s192 + $0x20] sm:$0xff]
      %v209 = vld [vmem:[%s192 + $0x28] sm:$0xff]
      %v210 = vld [vmem:[%s192 + $0x30] sm:$0xff]
      %v211 = vld [vmem:[%s192 + $0x38] sm:$0xff]
      %v212 = vld [vmem:[%s192 + $0x40] sm:$0xff]
      %v213 = vld [vmem:[%s192 + $0x48] sm:$0xff]
      %v214 = vld [vmem:[%s192 + $0x50] sm:$0xff]
      %v215 = vld [vmem:[%s192 + $0x58] sm:$0xff]
      %v216 = vld [vmem:[%s192 + $0x60] sm:$0xff]
      %v217 = vld [vmem:[%s192 + $0x68] sm:$0xff]
      %v218 = vld [vmem:[%s192 + $0x70] sm:$0xff]
      %v219 = vld [vmem:[%s192 + $0x78] sm:$0xff]
      %v220 = vld [vmem:[%s192 + $0x80] sm:$0xff]
      %v221 = vld [vmem:[%s192 + $0x88] sm:$0xff]
      %v222 = vld [vmem:[%s192 + $0x90] sm:$0xff]
      %v223 = vld [vmem:[%s192 + $0x98] sm:$0xff]
      %v224 = vld [vmem:[%s192 + $0xa0] sm:$0xff]
      %v225 = vld [vmem:[%s192 + $0xa8] sm:$0xff]
      %v226 = vld [vmem:[%s192 + $0xb0] sm:$0xff]
      %v227 = vld [vmem:[%s192 + $0xb8] sm:$0xff]
      %v228 = vld [vmem:[%s192 + $0xc0] sm:$0xff]
      %v229 = vld [vmem:[%s192 + $0xc8] sm:$0xff]
      %v230 = vld [vmem:[%s192 + $0xd0] sm:$0xff]
      %v231 = vld [vmem:[%s192 + $0xd8] sm:$0xff]
      %v232 = vld [vmem:[%s192 + $0xe0] sm:$0xff]
      %v233 = vld [vmem:[%s192 + $0xe8] sm:$0xff]
      %v234 = vld [vmem:[%s192 + $0xf0] sm:$0xff]
      %v235 = vld [vmem:[%s192 + $0xf8] sm:$0xff]
      %v236 = vld [vmem:[%s192 + $0x100] sm:$0xff]
      %v237 = vld [vmem:[%s192 + $0x108] sm:$0xff]
      %v238 = vld [vmem:[%s192 + $0x110] sm:$0xff]
      %v239 = vld [vmem:[%s192 + $0x118] sm:$0xff]
      %v240 = vld [vmem:[%s192 + $0x120] sm:$0xff]
      %v241 = vld [vmem:[%s192 + $0x128] sm:$0xff]
      %v242 = vld [vmem:[%s192 + $0x130] sm:$0xff]
      %v243 = vld [vmem:[%s192 + $0x138] sm:$0xff]
      %v244 = vld [vmem:[%s192 + $0x140] sm:$0xff]
      %v245 = vld [vmem:[%s192 + $0x148] sm:$0xff]
      %v246 = vld [vmem:[%s192 + $0x150] sm:$0xff]
      %v247 = vld [vmem:[%s192 + $0x158] sm:$0xff]
      %v248 = vld [vmem:[%s192 + $0x160] sm:$0xff]
      %v249 = vld [vmem:[%s192 + $0x168] sm:$0xff]
      %v250 = vld [vmem:[%s192 + $0x170] sm:$0xff]
      %v251 = vld [vmem:[%s192 + $0x178] sm:$0xff]
      %v252 = vld [vmem:[%s192 + $0x180] sm:$0xff]
      %v253 = vld [vmem:[%s192 + $0x188] sm:$0xff]
      %v254 = vld [vmem:[%s192 + $0x190] sm:$0xff]
      %v255 = vld [vmem:[%s192 + $0x198] sm:$0xff]
      %v256 = vld [vmem:[%s192 + $0x1a0] sm:$0xff]
      %v257 = vld [vmem:[%s192 + $0x1a8] sm:$0xff]
      %v258 = vld [vmem:[%s192 + $0x1b0] sm:$0xff]
      %v259 = vld [vmem:[%s192 + $0x1b8] sm:$0xff]
      %v260 = vld [vmem:[%s192 + $0x1c0] sm:$0xff]
      %v261 = vld [vmem:[%s192 + $0x1c8] sm:$0xff]
      %v262 = vld [vmem:[%s192 + $0x1d0] sm:$0xff]
      %v263 = vld [vmem:[%s192 + $0x1d8] sm:$0xff]
      %v264 = vld [vmem:[%s192 + $0x1e0] sm:$0xff]
      %v265 = vld [vmem:[%s192 + $0x1e8] sm:$0xff]
      %v266 = vld [vmem:[%s192 + $0x1f0] sm:$0xff]
      %v267 = vld [vmem:[%s192 + $0x1f8] sm:$0xff]
      %v268 = vld [vmem:[%s2] sm:$0xff]
      %270 = vset.pattern.permute.xlu0 0
      %271 = vperm.xlu0 %270, %v268
      %v272 = vpop.permute.xlu0 %271
      %274 = vmatprep.subr.mxu0 0.0
      %275 = vmatpush1.msra.mxu0 %v204
      %276 = vmatprep.subr.mxu0 0.0
      %277 = vmatpush1.msra.mxu0 %v205
      %278 = vmatprep.subr.mxu0 0.0
      %279 = vmatpush1.msra.mxu0 %v206
      %280 = vmatprep.subr.mxu0 0.0
      %281 = vmatpush1.msra.mxu0 %v207
      %282 = vmatprep.subr.mxu0 0.0
      %283 = vmatpush1.msra.mxu0 %v208
      %284 = vmatprep.subr.mxu0 0.0
      %285 = vmatpush1.msra.mxu0 %v209
      %286 = vmatprep.subr.mxu0 0.0
      %287 = vmatpush1.msra.mxu0 %v210
      %288 = vmatprep.subr.mxu0 0.0
      %289 = vmatpush1.msra.mxu0 %v211
      %290 = vmatprep.subr.mxu0 0.0
      %291 = vmatpush1.msra.mxu0 %v212
      %292 = vmatprep.subr.mxu0 0.0
      %293 = vmatpush1.msra.mxu0 %v213
      %294 = vmatprep.subr.mxu0 0.0
      %295 = vmatpush1.msra.mxu0 %v214
      %296 = vmatprep.subr.mxu0 0.0
      %297 = vmatpush1.msra.mxu0 %v215
      %298 = vmatprep.subr.mxu0 0.0
      %299 = vmatpush1.msra.mxu0 %v216
      %300 = vmatprep.subr.mxu0 0.0
      %301 = vmatpush1.msra.mxu0 %v217
      %302 = vmatprep.subr.mxu0 0.0
      %303 = vmatpush1.msra.mxu0 %v218
      %304 = vmatprep.subr.mxu0 0.0
      %305 = vmatpush1.msra.mxu0 %v219
      %306 = vmatprep.subr.mxu0 0.0
      %307 = vmatpush1.msra.mxu0 %v220
      %308 = vmatprep.subr.mxu0 0.0
      %309 = vmatpush1.msra.mxu0 %v221
      %310 = vmatprep.subr.mxu0 0.0
      %311 = vmatpush1.msra.mxu0 %v222
      %312 = vmatprep.subr.mxu0 0.0
      %313 = vmatpush1.msra.mxu0 %v223
      %314 = vmatprep.subr.mxu0 0.0
      %315 = vmatpush1.msra.mxu0 %v224
      %316 = vmatprep.subr.mxu0 0.0
      %317 = vmatpush1.msra.mxu0 %v225
      %318 = vmatprep.subr.mxu0 0.0
      %319 = vmatpush1.msra.mxu0 %v226
      %320 = vmatprep.subr.mxu0 0.0
      %321 = vmatpush1.msra.mxu0 %v227
      %322 = vmatprep.subr.mxu0 0.0
      %323 = vmatpush1.msra.mxu0 %v228
      %324 = vmatprep.subr.mxu0 0.0
      %325 = vmatpush1.msra.mxu0 %v229
      %326 = vmatprep.subr.mxu0 0.0
      %327 = vmatpush1.msra.mxu0 %v230
      %328 = vmatprep.subr.mxu0 0.0
      %329 = vmatpush1.msra.mxu0 %v231
      %330 = vmatprep.subr.mxu0 0.0
      %331 = vmatpush1.msra.mxu0 %v232
      %332 = vmatprep.subr.mxu0 0.0
      %333 = vmatpush1.msra.mxu0 %v233
      %334 = vmatprep.subr.mxu0 0.0
      %335 = vmatpush1.msra.mxu0 %v234
      %336 = vmatprep.subr.mxu0 0.0
      %337 = vmatpush1.msra.mxu0 %v235
      %338 = vmatprep.mubr.f32.mxu0 %v201
      %339 = vmatmul.mubr.f32.gmra.mrb[0].mxu0 %v200
      %v340 = vpop.f32.mrb[0].mxu0
      %v341 = vadd.f32 %v272, %v340
      %v342 = vpop.f32.mrb[0].mxu0
      %343 = vdwg.mxu0
      %344 = vmatprep.subr.mxu0 0.0
      %345 = vmatpush1.msra.mxu0 %v236
      %346 = vmatprep.subr.mxu0 0.0
      %347 = vmatpush1.msra.mxu0 %v237
      %348 = vmatprep.subr.mxu0 0.0
      %349 = vmatpush1.msra.mxu0 %v238
      %350 = vmatprep.subr.mxu0 0.0
      %351 = vmatpush1.msra.mxu0 %v239
      %352 = vmatprep.subr.mxu0 0.0
      %353 = vmatpush1.msra.mxu0 %v240
      %354 = vmatprep.subr.mxu0 0.0
      %355 = vmatpush1.msra.mxu0 %v241
      %356 = vmatprep.subr.mxu0 0.0
      %357 = vmatpush1.msra.mxu0 %v242
      %358 = vmatprep.subr.mxu0 0.0
      %359 = vmatpush1.msra.mxu0 %v243
      %360 = vmatprep.subr.mxu0 0.0
      %361 = vmatpush1.msra.mxu0 %v244
      %362 = vmatprep.subr.mxu0 0.0
      %363 = vmatpush1.msra.mxu0 %v245
      %364 = vmatprep.subr.mxu0 0.0
      %365 = vmatpush1.msra.mxu0 %v246
      %366 = vmatprep.subr.mxu0 0.0
      %367 = vmatpush1.msra.mxu0 %v247
      %368 = vmatprep.subr.mxu0 0.0
      %369 = vmatpush1.msra.mxu0 %v248
      %370 = vmatprep.subr.mxu0 0.0
      %371 = vmatpush1.msra.mxu0 %v249
      %372 = vmatprep.subr.mxu0 0.0
      %373 = vmatpush1.msra.mxu0 %v250
      %374 = vmatprep.subr.mxu0 0.0
      %375 = vmatpush1.msra.mxu0 %v251
      %376 = vmatprep.subr.mxu0 0.0
      %377 = vmatpush1.msra.mxu0 %v252
      %378 = vmatprep.subr.mxu0 0.0
      %379 = vmatpush1.msra.mxu0 %v253
      %380 = vmatprep.subr.mxu0 0.0
      %381 = vmatpush1.msra.mxu0 %v254
      %382 = vmatprep.subr.mxu0 0.0
      %383 = vmatpush1.msra.mxu0 %v255
      %384 = vmatprep.subr.mxu0 0.0
      %385 = vmatpush1.msra.mxu0 %v256
      %386 = vmatprep.subr.mxu0 0.0
      %387 = vmatpush1.msra.mxu0 %v257
      %388 = vmatprep.subr.mxu0 0.0
      %389 = vmatpush1.msra.mxu0 %v258
      %390 = vmatprep.subr.mxu0 0.0
      %391 = vmatpush1.msra.mxu0 %v259
      %392 = vmatprep.subr.mxu0 0.0
      %393 = vmatpush1.msra.mxu0 %v260
      %394 = vmatprep.subr.mxu0 0.0
      %395 = vmatpush1.msra.mxu0 %v261
      %396 = vmatprep.subr.mxu0 0.0
      %397 = vmatpush1.msra.mxu0 %v262
      %398 = vmatprep.subr.mxu0 0.0
      %399 = vmatpush1.msra.mxu0 %v263
      %400 = vmatprep.subr.mxu0 0.0
      %401 = vmatpush1.msra.mxu0 %v264
      %402 = vmatprep.subr.mxu0 0.0
      %403 = vmatpush1.msra.mxu0 %v265
      %404 = vmatprep.subr.mxu0 0.0
      %405 = vmatpush1.msra.mxu0 %v266
      %406 = vmatprep.subr.mxu0 0.0
      %407 = vmatpush1.msra.mxu0 %v267
      %408 = vmatprep.mubr.f32.mxu0 %v203
      %409 = vmatmul.mubr.f32.gmra.mrb[0].mxu0 %v202
      %v410 = vpop.f32.mrb[0].mxu0
      %v411 = vadd.f32 %v341, %v410
      %v412 = vpop.f32.mrb[0].mxu0
      %413 = vdwg.mxu0
      %414 = vst [vmem:[%s199] sm:$0xff] %v411
      %p415 = scmp.lt.s32.totalorder %s18, 1
      %s416 = scalar_select %p415, %s18, 1
      %p417 = scmp.lt.s32.totalorder %s19, 0
      %s418 = scalar_select %p417, %s19, 0
      %s419 = sadd.s32 %s418, %s416
      %s420 = smul.addr %s419, 8
      %s421 = scalar_lea.vmem %s3, %s420
      // Predicated region
      $region33: #{segmenter_forward.1} parent=31 // pred_check
        %p422 = pneg %p116
      $region34: #{segmenter_forward.1} parent=31 // pred_check_branch
        %424 = sbr.rel (%p422) target = $region36
      $region35: #{segmenter_forward.1} parent=31 // pred_region
        _
      $region36: #{segmenter_forward.1} parent=31 // pred_fallthru
        _
    $region32: #{segmenter_forward.1} parent=5 // pred_fallthru
      _
    %p425 = scmp.le.s32.totalorder 2, %s9
    // Predicated region
    $region37: #{segmenter_forward.1} parent=5 // pred_check
      %p426 = pneg %p425
    $region38: #{segmenter_forward.1} parent=5 // pred_check_branch
      %428 = sbr.rel (%p426) target = $region40
    $region39: #{segmenter_forward.1} parent=5 // pred_region
      %s429 = ssub.s32 %s9, 2
      // Predicated region
      $region41: #{segmenter_forward.1} parent=39 // pred_check
        %p430 = pneg %p122
      $region42: #{segmenter_forward.1} parent=39 // pred_check_branch
        %432 = sbr.rel (%p430) target = $region44
      $region43: #{segmenter_forward.1} parent=39 // pred_region
        %p433 = scmp.lt.s32.totalorder %s20, 1
        %s434 = scalar_select %p433, %s20, 1
        %p435 = scmp.lt.s32.totalorder %s21, 0
        %s436 = scalar_select %p435, %s21, 0
        %s437 = sadd.s32 %s436, %s434
        %s438 = smul.addr %s437, 8
        %s439 = scalar_lea.vmem %s3, %s438
      $region44: #{segmenter_forward.1} parent=39 // pred_fallthru
        _
    $region40: #{segmenter_forward.1} parent=5 // pred_fallthru
      _
  $region6: #{segmenter_forward.1} parent=0 // loop_footer
    %s13 = sadd.s32 1, %s9
  $region7: #{segmenter_forward.1} parent=0 // loop_footer_branch
    %8 = sbr.rel target = $region3
  $region8: #{segmenter_forward.1} parent=0 // loop_exit
    _

</llo_original>
